<compile_context>
chip_gen: v7x
topology: tpu7x:2x2x1
jax: 0.10.0
libtpu: 0.0.40
codegen_flags: <defaults>
</compile_context>

<pallas_src>
import functools

import numpy as np
import jax
import jax.numpy as jnp
from jax.experimental import pallas as pl
from jax.experimental.pallas import tpu as pltpu


def _round_up(x, m):
    return ((x + m - 1) // m) * m


# ----------------------------- Pallas kernel ------------------------------ #
def _ae_fused_kernel(x_ref, w_ref, b_ref, o_ref, *, n_layers):
    """Whole AE stack on one (TM, F) batch tile.

    x_ref: (TM, F) activations (compute dtype, f32 or bf16)
    w_ref: (L, F, F) stacked folded weights, (in, out) layout (compute dtype)
    b_ref: (L, 1, F) stacked folded biases (f32)
    o_ref: (TM, F) output (f32 or bf16)
    """
    h = x_ref[...]
    operand_dtype = x_ref.dtype
    for l in range(n_layers):  # static unroll; weights stay VMEM-resident
        z = jnp.dot(h.astype(operand_dtype), w_ref[l],
                    preferred_element_type=jnp.float32)       # MXU, f32 acc
        h = jnp.maximum(z + b_ref[l], 0.0)                     # bias + ReLU (f32 epilogue)
    o_ref[...] = h.astype(o_ref.dtype)


# ------------------------- one-time weight staging ------------------------- #
def prepare_ae(params, *, compute_dtype=jnp.float32, eps=1e-5):
    """Fold eval-mode BN into each Linear, pad to 128 lanes, stack all layers.

    Done once (numpy, no per-call device dispatches); result is reused by every
    forward call.  params: list of (W (d_out,d_in), b, gamma, beta, rm, rv).
    """
    n_layers = len(params)
    d_in = int(params[0][0].shape[1])
    d_final = int(params[-1][0].shape[0])
    feat = [d_in] + [int(p[0].shape[0]) for p in params]
    # TODO(synk): per-layer feature slabs for mixed dims > 128 (global pad for now).
    F = _round_up(max(feat), 128)

    w_stack = np.zeros((n_layers, F, F), np.float32)
    b_stack = np.zeros((n_layers, 1, F), np.float32)
    for l, (w, b, g, bt, rm, rv) in enumerate(params):
        w = np.asarray(w, np.float32)
        b = np.asarray(b, np.float32)
        g = np.asarray(g, np.float32)
        bt = np.asarray(bt, np.float32)
        rm = np.asarray(rm, np.float32)
        rv = np.asarray(rv, np.float32)
        scale = g / np.sqrt(rv + eps)
        w_f = (w * scale[:, None]).T              # folded, (d_in, d_out) layout
        b_f = (b - rm) * scale + bt
        d_out, d_lin = w.shape
        w_stack[l, :d_lin, :d_out] = w_f          # padded rows/cols stay exactly 0
        b_stack[l, 0, :d_out] = b_f

    return dict(
        w_stack=jnp.asarray(w_stack, compute_dtype),
        b_stack=jnp.asarray(b_stack, jnp.float32),
        n_layers=n_layers, d_in=d_in, d_final=d_final, F=F,
        compute_dtype=compute_dtype,
    )


# ------------------------------ fused forward ------------------------------ #
@functools.partial(
    jax.jit,
    static_argnames=("n_layers", "d_in", "d_final", "F", "TM", "n_pad",
                     "compute_dtype", "out_dtype", "vmem_limit"))
def _ae_forward_jit(x, w_stack, b_stack, *, n_layers, d_in, d_final, F, TM,
                    n_pad, compute_dtype, out_dtype, vmem_limit):
    n = x.shape[0]
    # Pad inside the jit'd program; allow_input_fusion lets XLA fuse this
    # producer into the pallas_call input instead of a separate HBM round-trip.
    x_pad = jnp.zeros((n_pad, F), compute_dtype)
    x_pad = x_pad.at[:n, :d_in].set(x.astype(compute_dtype))

    out = pl.pallas_call(
        functools.partial(_ae_fused_kernel, n_layers=n_layers),
        out_shape=jax.ShapeDtypeStruct((n_pad, F), out_dtype),
        grid=(n_pad // TM,),
        in_specs=[
            pl.BlockSpec((TM, F), lambda i: (i, 0)),                # batch tile streams
            pl.BlockSpec((n_layers, F, F), lambda i: (0, 0, 0)),    # resident weights
            pl.BlockSpec((n_layers, 1, F), lambda i: (0, 0, 0)),    # resident biases
        ],
        out_specs=pl.BlockSpec((TM, F), lambda i: (i, 0)),
        compiler_params=pltpu.CompilerParams(
            dimension_semantics=("parallel",),      # shard batch tiles across TCs
            allow_input_fusion=[True, False, False],
            vmem_limit_bytes=vmem_limit,
        ),
    )(x_pad, w_stack, b_stack)

    # NOTE: padded batch rows hold relu(b)-derived values; they are sliced off here.
    return out[:n, :d_final]


def ae_forward_pallas(x, prepared, *, tm=512):
    """Fused AE forward using the cached staged weights from prepare_ae()."""
    compute_dtype = prepared["compute_dtype"]
    is_bf16 = jnp.dtype(compute_dtype) == jnp.dtype(jnp.bfloat16)
    out_dtype = compute_dtype            # bf16 path -> bf16 output (half writeback)

    n = x.shape[0]
    sub = 16 if is_bf16 else 8           # bf16 vregs pack (16,128); f32 (8,128)
    n_pad0 = _round_up(max(n, sub), sub)
    # >=2 grid steps whenever the batch can be split -> both v7x TensorCores.
    min_steps = 2 if n_pad0 >= 2 * sub else 1
    steps = max(pl.cdiv(n_pad0, tm), min_steps)
    TM = _round_up(pl.cdiv(n_pad0, steps), sub)
    n_pad = steps * TM

    F = prepared["F"]
    n_layers = prepared["n_layers"]
    in_bytes = jnp.dtype(compute_dtype).itemsize
    out_bytes = jnp.dtype(out_dtype).itemsize
    budget = (2 * n_layers * F * F * in_bytes      # double-buffered weights
              + 2 * n_layers * F * 4               # biases
              + 2 * TM * F * in_bytes              # x tiles
              + 2 * TM * F * out_bytes)            # out tiles
    vmem_limit = int(min(max(2 * budget, 16 * 2 ** 20), 48 * 2 ** 20))

    return _ae_forward_jit(
        x, prepared["w_stack"], prepared["b_stack"],
        n_layers=n_layers, d_in=prepared["d_in"], d_final=prepared["d_final"],
        F=F, TM=TM, n_pad=n_pad,
        compute_dtype=compute_dtype, out_dtype=out_dtype,
        vmem_limit=vmem_limit)


# --------------------------- module construction --------------------------- #
def build_ae_layer_dims(dims):
    """Reproduce the encoder/decoder layer-dim logic of AE.__init__."""
    encoder = []
    for i in range(len(dims)):
        if i + 1 >= len(dims):           # guard (PyTorch code would IndexError here)
            break
        if dims[i] < dims[i + 1]:
            break
        encoder.append((dims[i], dims[i + 1]))
    decoder = []
    for i in range(len(dims) // 2, len(dims)):
        if i + 1 >= len(dims):           # mirrors the try/except IndexError
            break
        decoder.append((dims[i], dims[i + 1]))
    return encoder, decoder


def init_params(key, layer_dims):
    """PyTorch-Linear-style init; BN stats randomized so the folding check is real."""
    params = []
    for (d_in, d_out) in layer_dims:
        key, kw, kb, kg, kbe, krm, krv = jax.random.split(key, 7)
        bound = 1.0 / (d_in ** 0.5)
        w = jax.random.uniform(kw, (d_out, d_in), jnp.float32, -bound, bound)
        b = jax.random.uniform(kb, (d_out,), jnp.float32, -bound, bound)
        gamma = jax.random.uniform(kg, (d_out,), jnp.float32, 0.5, 1.5)
        beta = 0.1 * jax.random.normal(kbe, (d_out,), jnp.float32)
        rm = 0.1 * jax.random.normal(krm, (d_out,), jnp.float32)
        rv = jax.random.uniform(krv, (d_out,), jnp.float32, 0.5, 1.5)
        params.append((w, b, gamma, beta, rm, rv))
    return params


def ae_forward_ref(x, params, eps=1e-5):
    """Unfolded eval-mode reference (Linear -> BN(eval) -> ReLU per layer)."""
    h = x
    for (w, b, g, bt, rm, rv) in params:
        z = h @ w.T + b
        y = (z - rm) / jnp.sqrt(rv + eps) * g + bt
        h = jnp.maximum(y, 0.0)
        # Dropout (encoder only) is identity in eval mode.
    return h


# --------------------------------- main ------------------------------------ #
if __name__ == "__main__":
    dims = [32, 16, 8, 16, 32]          # symmetric AE layer sizes
    p = 0.2                             # dropout prob (inactive in eval mode)
    batch = 8

    enc_dims, dec_dims = build_ae_layer_dims(dims)
    all_dims = enc_dims + dec_dims      # forward = decoder(encoder(img))

    key = jax.random.PRNGKey(0)
    key, kx = jax.random.split(key)
    x = jax.random.normal(kx, (batch, dims[0]), jnp.float32)

    params = init_params(key, all_dims)
    ref = ae_forward_ref(x, params)

    # f32 path: must match the unfolded eval-mode reference tightly.
    prep_f32 = prepare_ae(params, compute_dtype=jnp.float32)
    out_f32 = jax.block_until_ready(ae_forward_pallas(x, prep_f32))
    assert out_f32.shape == (batch, dims[-1]), out_f32.shape
    assert jnp.allclose(out_f32, ref, atol=1e-4, rtol=1e-4), "f32 mismatch vs reference"

    # bf16 path (bf16 operands + bf16 output, f32 accumulation/epilogue).
    prep_bf16 = prepare_ae(params, compute_dtype=jnp.bfloat16)
    out_bf16 = jax.block_until_ready(ae_forward_pallas(x, prep_bf16))
    assert out_bf16.shape == (batch, dims[-1]), out_bf16.shape
    assert out_bf16.dtype == jnp.bfloat16, out_bf16.dtype
    assert jnp.allclose(out_bf16.astype(jnp.float32), ref, atol=1e-1, rtol=1e-1), \
        "bf16 mismatch vs reference"

    # Multi-tile batch: exercises the >=2-grid-step (megacore) path + tail padding.
    key, kx2 = jax.random.split(key)
    x_big = jax.random.normal(kx2, (40, dims[0]), jnp.float32)
    out_big = jax.block_until_ready(ae_forward_pallas(x_big, prep_f32))
    ref_big = ae_forward_ref(x_big, params)
    assert out_big.shape == (40, dims[-1]), out_big.shape
    assert jnp.allclose(out_big, ref_big, atol=1e-4, rtol=1e-4), "multi-tile mismatch"

    print("KERNEL_OK")
</pallas_src>

<mosaic_0001>
module attributes {stable_mosaic.version = 11 : i64} {
  func.func @_ae_fused_kernel(%arg0: i32, %arg1: memref<8x128xf32, #tpu.memory_space<vmem>>, %arg2: memref<4x128x128xf32, #tpu.memory_space<vmem>>, %arg3: memref<4x1x128xf32, #tpu.memory_space<vmem>>, %arg4: memref<8x128xf32, #tpu.memory_space<vmem>>) attributes {dimension_semantics = [#tpu.dimension_semantics<parallel>], iteration_bounds = array<i64: 1>, scalar_prefetch = 0 : i64, scratch_operands = 0 : i64, tpu.core_type = #tpu.core_type<tc>, window_params = [{transform_indices = @transform_0, window_bounds = array<i64: 8, 128>}, {pipeline_mode = #tpu.pipeline_mode<synchronous>, transform_indices = @transform_1, window_bounds = array<i64: 4, 128, 128>}, {pipeline_mode = #tpu.pipeline_mode<synchronous>, transform_indices = @transform_2, window_bounds = array<i64: 4, 1, 128>}, {transform_indices = @transform_3, window_bounds = array<i64: 8, 128>}]} {
    %c0 = arith.constant 0 : index
    %c0_0 = arith.constant 0 : index
    %0 = vector.load %arg1[%c0, %c0_0] : memref<8x128xf32, #tpu.memory_space<vmem>>, vector<8x128xf32>
    %c0_1 = arith.constant 0 : index
    %c0_2 = arith.constant 0 : index
    %c0_3 = arith.constant 0 : index
    %1 = vector.load %arg2[%c0_1, %c0_2, %c0_3] : memref<4x128x128xf32, #tpu.memory_space<vmem>>, vector<1x128x128xf32>
    %2 = vector.shape_cast %1 : vector<1x128x128xf32> to vector<128x128xf32>
    %cst = arith.constant dense<0.000000e+00> : vector<8x128xf32>
    %3 = tpu.matmul %0, %2, %cst {dimension_numbers = #tpu.dot_dimension_numbers<[1], [0], [0], [1], [0, 0, 1, 1], [], []>} : vector<8x128xf32>, vector<128x128xf32>, vector<8x128xf32> -> vector<8x128xf32>
    %c0_4 = arith.constant 0 : index
    %c0_5 = arith.constant 0 : index
    %c0_6 = arith.constant 0 : index
    %4 = vector.load %arg3[%c0_4, %c0_5, %c0_6] : memref<4x1x128xf32, #tpu.memory_space<vmem>>, vector<1x1x128xf32>
    %5 = vector.shape_cast %4 : vector<1x1x128xf32> to vector<1x128xf32>
    %6 = vector.broadcast %5 : vector<1x128xf32> to vector<8x128xf32>
    %7 = arith.addf %3, %6 : vector<8x128xf32>
    %cst_7 = arith.constant 0.000000e+00 : f32
    %8 = vector.broadcast %cst_7 : f32 to vector<8x128xf32>
    %9 = arith.maximumf %7, %8 : vector<8x128xf32>
    %c1 = arith.constant 1 : index
    %c0_8 = arith.constant 0 : index
    %c0_9 = arith.constant 0 : index
    %10 = vector.load %arg2[%c1, %c0_8, %c0_9] : memref<4x128x128xf32, #tpu.memory_space<vmem>>, vector<1x128x128xf32>
    %11 = vector.shape_cast %10 : vector<1x128x128xf32> to vector<128x128xf32>
    %cst_10 = arith.constant dense<0.000000e+00> : vector<8x128xf32>
    %12 = tpu.matmul %9, %11, %cst_10 {dimension_numbers = #tpu.dot_dimension_numbers<[1], [0], [0], [1], [0, 0, 1, 1], [], []>} : vector<8x128xf32>, vector<128x128xf32>, vector<8x128xf32> -> vector<8x128xf32>
    %c1_11 = arith.constant 1 : index
    %c0_12 = arith.constant 0 : index
    %c0_13 = arith.constant 0 : index
    %13 = vector.load %arg3[%c1_11, %c0_12, %c0_13] : memref<4x1x128xf32, #tpu.memory_space<vmem>>, vector<1x1x128xf32>
    %14 = vector.shape_cast %13 : vector<1x1x128xf32> to vector<1x128xf32>
    %15 = vector.broadcast %14 : vector<1x128xf32> to vector<8x128xf32>
    %16 = arith.addf %12, %15 : vector<8x128xf32>
    %cst_14 = arith.constant 0.000000e+00 : f32
    %17 = vector.broadcast %cst_14 : f32 to vector<8x128xf32>
    %18 = arith.maximumf %16, %17 : vector<8x128xf32>
    %c2 = arith.constant 2 : index
    %c0_15 = arith.constant 0 : index
    %c0_16 = arith.constant 0 : index
    %19 = vector.load %arg2[%c2, %c0_15, %c0_16] : memref<4x128x128xf32, #tpu.memory_space<vmem>>, vector<1x128x128xf32>
    %20 = vector.shape_cast %19 : vector<1x128x128xf32> to vector<128x128xf32>
    %cst_17 = arith.constant dense<0.000000e+00> : vector<8x128xf32>
    %21 = tpu.matmul %18, %20, %cst_17 {dimension_numbers = #tpu.dot_dimension_numbers<[1], [0], [0], [1], [0, 0, 1, 1], [], []>} : vector<8x128xf32>, vector<128x128xf32>, vector<8x128xf32> -> vector<8x128xf32>
    %c2_18 = arith.constant 2 : index
    %c0_19 = arith.constant 0 : index
    %c0_20 = arith.constant 0 : index
    %22 = vector.load %arg3[%c2_18, %c0_19, %c0_20] : memref<4x1x128xf32, #tpu.memory_space<vmem>>, vector<1x1x128xf32>
    %23 = vector.shape_cast %22 : vector<1x1x128xf32> to vector<1x128xf32>
    %24 = vector.broadcast %23 : vector<1x128xf32> to vector<8x128xf32>
    %25 = arith.addf %21, %24 : vector<8x128xf32>
    %cst_21 = arith.constant 0.000000e+00 : f32
    %26 = vector.broadcast %cst_21 : f32 to vector<8x128xf32>
    %27 = arith.maximumf %25, %26 : vector<8x128xf32>
    %c3 = arith.constant 3 : index
    %c0_22 = arith.constant 0 : index
    %c0_23 = arith.constant 0 : index
    %28 = vector.load %arg2[%c3, %c0_22, %c0_23] : memref<4x128x128xf32, #tpu.memory_space<vmem>>, vector<1x128x128xf32>
    %29 = vector.shape_cast %28 : vector<1x128x128xf32> to vector<128x128xf32>
    %cst_24 = arith.constant dense<0.000000e+00> : vector<8x128xf32>
    %30 = tpu.matmul %27, %29, %cst_24 {dimension_numbers = #tpu.dot_dimension_numbers<[1], [0], [0], [1], [0, 0, 1, 1], [], []>} : vector<8x128xf32>, vector<128x128xf32>, vector<8x128xf32> -> vector<8x128xf32>
    %c3_25 = arith.constant 3 : index
    %c0_26 = arith.constant 0 : index
    %c0_27 = arith.constant 0 : index
    %31 = vector.load %arg3[%c3_25, %c0_26, %c0_27] : memref<4x1x128xf32, #tpu.memory_space<vmem>>, vector<1x1x128xf32>
    %32 = vector.shape_cast %31 : vector<1x1x128xf32> to vector<1x128xf32>
    %33 = vector.broadcast %32 : vector<1x128xf32> to vector<8x128xf32>
    %34 = arith.addf %30, %33 : vector<8x128xf32>
    %cst_28 = arith.constant 0.000000e+00 : f32
    %35 = vector.broadcast %cst_28 : f32 to vector<8x128xf32>
    %36 = arith.maximumf %34, %35 : vector<8x128xf32>
    %c0_29 = arith.constant 0 : index
    %c0_30 = arith.constant 0 : index
    %37 = vector.load %arg4[%c0_29, %c0_30] : memref<8x128xf32, #tpu.memory_space<vmem>>, vector<8x128xf32>
    tpu.vector_store %arg4[%c0_29, %c0_30], %36 {strides = array<i32>} : memref<8x128xf32, #tpu.memory_space<vmem>>, vector<8x128xf32>,
    return
  }
  func.func @transform_0(%arg0: i32) -> (i32, i32) {
    %c0_i32 = arith.constant 0 : i32
    %c0_i32_0 = arith.constant 0 : i32
    return %arg0, %c0_i32 : i32, i32
  }
  func.func @transform_1(%arg0: i32) -> (i32, i32, i32) {
    %c0_i32 = arith.constant 0 : i32
    %c0_i32_0 = arith.constant 0 : i32
    %c0_i32_1 = arith.constant 0 : i32
    %c0_i32_2 = arith.constant 0 : i32
    return %c0_i32, %c0_i32_0, %c0_i32_1 : i32, i32, i32
  }
  func.func @transform_2(%arg0: i32) -> (i32, i32, i32) {
    %c0_i32 = arith.constant 0 : i32
    %c0_i32_0 = arith.constant 0 : i32
    %c0_i32_1 = arith.constant 0 : i32
    %c0_i32_2 = arith.constant 0 : i32
    return %c0_i32, %c0_i32_0, %c0_i32_1 : i32, i32, i32
  }
  func.func @transform_3(%arg0: i32) -> (i32, i32) {
    %c0_i32 = arith.constant 0 : i32
    %c0_i32_0 = arith.constant 0 : i32
    return %arg0, %c0_i32 : i32, i32
  }
}

</mosaic_0001>

<llo_original>
// kernel: _ae_forward_jit.2
$region0: #{_ae_forward_jit.2}
  #allocation0 [shape = 'u32[]', space=smem, size = 0x4, offset = 0x4, fixed_abs, tag = 'smem constant byte address 0x4 - core index']
  #allocation1 [shape = 'u32[144,128]{1,0:T(1,128)}', space=vmem, size = 0x12000, scoped, tag = 'internal scratch']
  #allocation2 [shape = 'u32[2048]{0}', space=vmem, size = 0x2000, scoped, tag = 'scoped memory for _ae_forward_jit.2']
  #allocation3 [shape = 'u32[2048]{0}', space=vmem, size = 0x2000, scoped, tag = 'scoped memory for _ae_forward_jit.2']
  #allocation4 [shape = 'u32[2048]{0}', space=vmem, size = 0x2000, scoped, tag = 'scoped memory for _ae_forward_jit.2']
  #allocation5 [shape = 'u32[2048]{0}', space=vmem, size = 0x2000, scoped, tag = 'scoped memory for _ae_forward_jit.2']
  #allocation6 [shape = 'u32[2048]{0}', space=vmem, size = 0x2000, scoped, tag = 'scoped memory for _ae_forward_jit.2']
  %s0 = inlined_call_operand.hbm [shape: f32[4,128,128], index: 0, kind: input, shape index: {}]
  %s1 = inlined_call_operand.vmem [shape: f32[4,1,128], index: 1, kind: input, shape index: {}]
  %s2 = inlined_call_operand.vmem [shape: f32[8,32], index: 2, kind: input, shape index: {}]
  %s3 = inlined_call_operand.<no memory space> [shape: f32[], index: 3, kind: input, shape index: {}]
  %s4 = inlined_call_operand.hbm [shape: f32[8,128], index: 4, kind: output, shape index: {}]
  %s5 = sld [smem:[#allocation0]]
  $region26: #{_ae_forward_jit.2} parent=0
    _
  %s7 = ssub.s32 1, %s5
  %s8 = scalar_select 0, %s7, %s5
  %v9 = vstv %s3
  $region1: #{_ae_forward_jit.2} parent=0
    #allocation7 [shape = 'u8[262144]{0}', space=vmem, size = 0x40000, scoped, tag = 'input window, operand 1, single buffered']
    #allocation8 [shape = 's32[1]{0}', space=sflag, size = 0x4, scoped, tag = 'scoped memory for _ae_forward_jit.2']
    #allocation9 [shape = 's32[1]{0}', space=sflag, size = 0x4, scoped, tag = 'scoped memory for _ae_forward_jit.2']
    #allocation10 [shape = 'u8[4096]{0}', space=vmem, size = 0x1000, scoped, tag = 'output window, operand 0, single buffered']
    #allocation11 [shape = 'u8[4096]{0}', space=vmem, size = 0x1000, dematerialized = true, scoped, tag = 'FusionAdapter Buffer %fusion.1 = f32[8,128]{1,0:T(8,128)} fusion(%param_2.1, %param_3), kind=kLoop, calls=%fused_computation.1.clone, metadata={op_name="jit(_ae_forward_jit)/scatter" stack_frame_id=9}']
    %10 = vsyncpa [#allocation8], 0
    %11 = vsyncpa [#allocation9], 0
    // Predicated region
    $region2: #{_ae_forward_jit.2} parent=1 // pred_check
      _
    $region3: #{_ae_forward_jit.2} parent=1 // pred_check_branch
      %13 = sbr.rel (0) target = $region5
    $region4: #{_ae_forward_jit.2} parent=1 // pred_region
      _
    $region5: #{_ae_forward_jit.2} parent=1 // pred_fallthru
      _
    // Predicated region
    $region6: #{_ae_forward_jit.2} parent=1 // pred_check
      _
    $region7: #{_ae_forward_jit.2} parent=1 // pred_check_branch
      %15 = sbr.rel (0) target = $region9
    $region8: #{_ae_forward_jit.2} parent=1 // pred_region
      %s17 = ssub.s32 8192, 8192
      %18 = vsyncadd [#allocation8], %s17
      %s19 = sshll.u32 [#allocation7], 4
      %s20 = int_to_ptr.vmem [resolvable:$true] %s19
      %25 = dma.hbm_to_vmem [thread:$0]  %s0, 8192, %s20, [#allocation8], 128, 128, 8
    $region9: #{_ae_forward_jit.2} parent=1 // pred_fallthru
      _
    // Predicated region
    $region10: #{_ae_forward_jit.2} parent=1 // pred_check
      _
    $region11: #{_ae_forward_jit.2} parent=1 // pred_check_branch
      %27 = sbr.rel (0) target = $region13
    $region12: #{_ae_forward_jit.2} parent=1 // pred_region
      _
    $region13: #{_ae_forward_jit.2} parent=1 // pred_fallthru
      _
    // Predicated region
    $region14: #{_ae_forward_jit.2} parent=1 // pred_check
      _
    $region15: #{_ae_forward_jit.2} parent=1 // pred_check_branch
      %29 = sbr.rel (0) target = $region17
    $region16: #{_ae_forward_jit.2} parent=1 // pred_region
      %30 = dma.done [#allocation8], 8192
    $region17: #{_ae_forward_jit.2} parent=1 // pred_fallthru
      _
    %v31 = vld [vmem:[%s2] sm:$0xff]
    %v32 = vlaneseq
    %v33 = vand.u32 %v32, 127
    %vm35 = vcmp.lt.s32.totalorder %v33, 32
    %v36 = vsel %vm35, %v31, %v9
    %38 = vst [vmem:[#allocation11] sm:$0xff] %v36
    %v39 = vld [vmem:[#allocation11] sm:$0xff]
    %v40 = vld [vmem:[#allocation7] sm:$0xff]
    %v41 = vld [vmem:[#allocation7 + $0x8] sm:$0xff]
    %v42 = vld [vmem:[#allocation7 + $0x10] sm:$0xff]
    %v43 = vld [vmem:[#allocation7 + $0x18] sm:$0xff]
    %v44 = vld [vmem:[#allocation7 + $0x20] sm:$0xff]
    %v45 = vld [vmem:[#allocation7 + $0x28] sm:$0xff]
    %v46 = vld [vmem:[#allocation7 + $0x30] sm:$0xff]
    %v47 = vld [vmem:[#allocation7 + $0x38] sm:$0xff]
    %v48 = vld [vmem:[#allocation7 + $0x40] sm:$0xff]
    %v49 = vld [vmem:[#allocation7 + $0x48] sm:$0xff]
    %v50 = vld [vmem:[#allocation7 + $0x50] sm:$0xff]
    %v51 = vld [vmem:[#allocation7 + $0x58] sm:$0xff]
    %v52 = vld [vmem:[#allocation7 + $0x60] sm:$0xff]
    %v53 = vld [vmem:[#allocation7 + $0x68] sm:$0xff]
    %v54 = vld [vmem:[#allocation7 + $0x70] sm:$0xff]
    %v55 = vld [vmem:[#allocation7 + $0x78] sm:$0xff]
    %v56 = vld [vmem:[%s1] sm:$0x1]
    %v58 = vlaneseq
    %v59 = vshrl.u32 %v58, 7
    %v60 = vsub.s32 0, %v59
    %v61 = vrot.slane %v56, %v60
    %63 = vmatprep.subr.mxu0 0.0
    %64 = vmatpush1.msra.mxu0 %v40
    %65 = vmatprep.subr.mxu0 0.0
    %66 = vmatpush1.msra.mxu0 %v41
    %67 = vmatprep.subr.mxu0 0.0
    %68 = vmatpush1.msra.mxu0 %v42
    %69 = vmatprep.subr.mxu0 0.0
    %70 = vmatpush1.msra.mxu0 %v43
    %71 = vmatprep.subr.mxu0 0.0
    %72 = vmatpush1.msra.mxu0 %v44
    %73 = vmatprep.subr.mxu0 0.0
    %74 = vmatpush1.msra.mxu0 %v45
    %75 = vmatprep.subr.mxu0 0.0
    %76 = vmatpush1.msra.mxu0 %v46
    %77 = vmatprep.subr.mxu0 0.0
    %78 = vmatpush1.msra.mxu0 %v47
    %79 = vmatprep.subr.mxu0 0.0
    %80 = vmatpush1.msra.mxu0 %v48
    %81 = vmatprep.subr.mxu0 0.0
    %82 = vmatpush1.msra.mxu0 %v49
    %83 = vmatprep.subr.mxu0 0.0
    %84 = vmatpush1.msra.mxu0 %v50
    %85 = vmatprep.subr.mxu0 0.0
    %86 = vmatpush1.msra.mxu0 %v51
    %87 = vmatprep.subr.mxu0 0.0
    %88 = vmatpush1.msra.mxu0 %v52
    %89 = vmatprep.subr.mxu0 0.0
    %90 = vmatpush1.msra.mxu0 %v53
    %91 = vmatprep.subr.mxu0 0.0
    %92 = vmatpush1.msra.mxu0 %v54
    %93 = vmatprep.subr.mxu0 0.0
    %94 = vmatpush1.msra.mxu0 %v55
    %95 = vmatprep.subr.mxu0 0.0
    %96 = vmatpush1.msra.mxu0 0.0
    %97 = vmatprep.subr.mxu0 0.0
    %98 = vmatpush1.msra.mxu0 0.0
    %99 = vmatprep.subr.mxu0 0.0
    %100 = vmatpush1.msra.mxu0 0.0
    %101 = vmatprep.subr.mxu0 0.0
    %102 = vmatpush1.msra.mxu0 0.0
    %103 = vmatprep.subr.mxu0 0.0
    %104 = vmatpush1.msra.mxu0 0.0
    %105 = vmatprep.subr.mxu0 0.0
    %106 = vmatpush1.msra.mxu0 0.0
    %107 = vmatprep.subr.mxu0 0.0
    %108 = vmatpush1.msra.mxu0 0.0
    %109 = vmatprep.subr.mxu0 0.0
    %110 = vmatpush1.msra.mxu0 0.0
    %111 = vmatprep.subr.mxu0 0.0
    %112 = vmatpush1.msra.mxu0 0.0
    %113 = vmatprep.subr.mxu0 0.0
    %114 = vmatpush1.msra.mxu0 0.0
    %115 = vmatprep.subr.mxu0 0.0
    %116 = vmatpush1.msra.mxu0 0.0
    %117 = vmatprep.subr.mxu0 0.0
    %118 = vmatpush1.msra.mxu0 0.0
    %119 = vmatprep.subr.mxu0 0.0
    %120 = vmatpush1.msra.mxu0 0.0
    %121 = vmatprep.subr.mxu0 0.0
    %122 = vmatpush1.msra.mxu0 0.0
    %123 = vmatprep.subr.mxu0 0.0
    %124 = vmatpush1.msra.mxu0 0.0
    %125 = vmatprep.subr.mxu0 0.0
    %126 = vmatpush1.msra.mxu0 0.0
    %127 = vmatprep.mubr.f32.mxu0 0.0
    %128 = vmatmul.mubr.f32.gmra.mrb[0].mxu0 %v39
    %v129 = vpop.f32.mrb[0].mxu0
    %v130 = vadd.f32 %v61, %v129
    %v131 = vpop.f32.mrb[0].mxu0
    %132 = vdwg.mxu0
    %v133 = vmax.f32 %v130, 0.0
    %s134 = scalar_lea.vmem [#allocation7], 128
    %v135 = vld [vmem:[%s134] sm:$0xff]
    %v136 = vld [vmem:[%s134 + $0x8] sm:$0xff]
    %v137 = vld [vmem:[%s134 + $0x10] sm:$0xff]
    %v138 = vld [vmem:[%s134 + $0x18] sm:$0xff]
    %v139 = vld [vmem:[%s134 + $0x20] sm:$0xff]
    %v140 = vld [vmem:[%s134 + $0x28] sm:$0xff]
    %v141 = vld [vmem:[%s134 + $0x30] sm:$0xff]
    %v142 = vld [vmem:[%s134 + $0x38] sm:$0xff]
    %v143 = vld [vmem:[%s134 + $0x40] sm:$0xff]
    %v144 = vld [vmem:[%s134 + $0x48] sm:$0xff]
    %v145 = vld [vmem:[%s134 + $0x50] sm:$0xff]
    %v146 = vld [vmem:[%s134 + $0x58] sm:$0xff]
    %v147 = vld [vmem:[%s134 + $0x60] sm:$0xff]
    %v148 = vld [vmem:[%s134 + $0x68] sm:$0xff]
    %v149 = vld [vmem:[%s134 + $0x70] sm:$0xff]
    %v150 = vld [vmem:[%s134 + $0x78] sm:$0xff]
    %s151 = scalar_lea.vmem %s1, 1
    %v152 = vld [vmem:[%s151] sm:$0x1]
    %v154 = vlaneseq
    %v155 = vshrl.u32 %v154, 7
    %v156 = vsub.s32 0, %v155
    %v157 = vrot.slane %v152, %v156
    %159 = vmatprep.subr.mxu0 0.0
    %160 = vmatpush1.msra.mxu0 %v135
    %161 = vmatprep.subr.mxu0 0.0
    %162 = vmatpush1.msra.mxu0 %v136
    %163 = vmatprep.subr.mxu0 0.0
    %164 = vmatpush1.msra.mxu0 %v137
    %165 = vmatprep.subr.mxu0 0.0
    %166 = vmatpush1.msra.mxu0 %v138
    %167 = vmatprep.subr.mxu0 0.0
    %168 = vmatpush1.msra.mxu0 %v139
    %169 = vmatprep.subr.mxu0 0.0
    %170 = vmatpush1.msra.mxu0 %v140
    %171 = vmatprep.subr.mxu0 0.0
    %172 = vmatpush1.msra.mxu0 %v141
    %173 = vmatprep.subr.mxu0 0.0
    %174 = vmatpush1.msra.mxu0 %v142
    %175 = vmatprep.subr.mxu0 0.0
    %176 = vmatpush1.msra.mxu0 %v143
    %177 = vmatprep.subr.mxu0 0.0
    %178 = vmatpush1.msra.mxu0 %v144
    %179 = vmatprep.subr.mxu0 0.0
    %180 = vmatpush1.msra.mxu0 %v145
    %181 = vmatprep.subr.mxu0 0.0
    %182 = vmatpush1.msra.mxu0 %v146
    %183 = vmatprep.subr.mxu0 0.0
    %184 = vmatpush1.msra.mxu0 %v147
    %185 = vmatprep.subr.mxu0 0.0
    %186 = vmatpush1.msra.mxu0 %v148
    %187 = vmatprep.subr.mxu0 0.0
    %188 = vmatpush1.msra.mxu0 %v149
    %189 = vmatprep.subr.mxu0 0.0
    %190 = vmatpush1.msra.mxu0 %v150
    %191 = vmatprep.subr.mxu0 0.0
    %192 = vmatpush1.msra.mxu0 0.0
    %193 = vmatprep.subr.mxu0 0.0
    %194 = vmatpush1.msra.mxu0 0.0
    %195 = vmatprep.subr.mxu0 0.0
    %196 = vmatpush1.msra.mxu0 0.0
    %197 = vmatprep.subr.mxu0 0.0
    %198 = vmatpush1.msra.mxu0 0.0
    %199 = vmatprep.subr.mxu0 0.0
    %200 = vmatpush1.msra.mxu0 0.0
    %201 = vmatprep.subr.mxu0 0.0
    %202 = vmatpush1.msra.mxu0 0.0
    %203 = vmatprep.subr.mxu0 0.0
    %204 = vmatpush1.msra.mxu0 0.0
    %205 = vmatprep.subr.mxu0 0.0
    %206 = vmatpush1.msra.mxu0 0.0
    %207 = vmatprep.subr.mxu0 0.0
    %208 = vmatpush1.msra.mxu0 0.0
    %209 = vmatprep.subr.mxu0 0.0
    %210 = vmatpush1.msra.mxu0 0.0
    %211 = vmatprep.subr.mxu0 0.0
    %212 = vmatpush1.msra.mxu0 0.0
    %213 = vmatprep.subr.mxu0 0.0
    %214 = vmatpush1.msra.mxu0 0.0
    %215 = vmatprep.subr.mxu0 0.0
    %216 = vmatpush1.msra.mxu0 0.0
    %217 = vmatprep.subr.mxu0 0.0
    %218 = vmatpush1.msra.mxu0 0.0
    %219 = vmatprep.subr.mxu0 0.0
    %220 = vmatpush1.msra.mxu0 0.0
    %221 = vmatprep.subr.mxu0 0.0
    %222 = vmatpush1.msra.mxu0 0.0
    %223 = vmatprep.mubr.f32.mxu0 0.0
    %224 = vmatmul.mubr.f32.gmra.mrb[0].mxu0 %v133
    %v225 = vpop.f32.mrb[0].mxu0
    %v226 = vadd.f32 %v157, %v225
    %v227 = vpop.f32.mrb[0].mxu0
    %228 = vdwg.mxu0
    %v229 = vmax.f32 %v226, 0.0
    %s230 = scalar_lea.vmem [#allocation7], 256
    %v231 = vld [vmem:[%s230] sm:$0xff]
    %v232 = vld [vmem:[%s230 + $0x8] sm:$0xff]
    %v233 = vld [vmem:[%s230 + $0x10] sm:$0xff]
    %v234 = vld [vmem:[%s230 + $0x18] sm:$0xff]
    %v235 = vld [vmem:[%s230 + $0x20] sm:$0xff]
    %v236 = vld [vmem:[%s230 + $0x28] sm:$0xff]
    %v237 = vld [vmem:[%s230 + $0x30] sm:$0xff]
    %v238 = vld [vmem:[%s230 + $0x38] sm:$0xff]
    %v239 = vld [vmem:[%s230 + $0x40] sm:$0xff]
    %v240 = vld [vmem:[%s230 + $0x48] sm:$0xff]
    %v241 = vld [vmem:[%s230 + $0x50] sm:$0xff]
    %v242 = vld [vmem:[%s230 + $0x58] sm:$0xff]
    %v243 = vld [vmem:[%s230 + $0x60] sm:$0xff]
    %v244 = vld [vmem:[%s230 + $0x68] sm:$0xff]
    %v245 = vld [vmem:[%s230 + $0x70] sm:$0xff]
    %v246 = vld [vmem:[%s230 + $0x78] sm:$0xff]
    %s247 = scalar_lea.vmem %s1, 2
    %v248 = vld [vmem:[%s247] sm:$0x1]
    %v250 = vlaneseq
    %v251 = vshrl.u32 %v250, 7
    %v252 = vsub.s32 0, %v251
    %v253 = vrot.slane %v248, %v252
    %255 = vmatprep.subr.mxu0 0.0
    %256 = vmatpush1.msra.mxu0 %v231
    %257 = vmatprep.subr.mxu0 0.0
    %258 = vmatpush1.msra.mxu0 %v232
    %259 = vmatprep.subr.mxu0 0.0
    %260 = vmatpush1.msra.mxu0 %v233
    %261 = vmatprep.subr.mxu0 0.0
    %262 = vmatpush1.msra.mxu0 %v234
    %263 = vmatprep.subr.mxu0 0.0
    %264 = vmatpush1.msra.mxu0 %v235
    %265 = vmatprep.subr.mxu0 0.0
    %266 = vmatpush1.msra.mxu0 %v236
    %267 = vmatprep.subr.mxu0 0.0
    %268 = vmatpush1.msra.mxu0 %v237
    %269 = vmatprep.subr.mxu0 0.0
    %270 = vmatpush1.msra.mxu0 %v238
    %271 = vmatprep.subr.mxu0 0.0
    %272 = vmatpush1.msra.mxu0 %v239
    %273 = vmatprep.subr.mxu0 0.0
    %274 = vmatpush1.msra.mxu0 %v240
    %275 = vmatprep.subr.mxu0 0.0
    %276 = vmatpush1.msra.mxu0 %v241
    %277 = vmatprep.subr.mxu0 0.0
    %278 = vmatpush1.msra.mxu0 %v242
    %279 = vmatprep.subr.mxu0 0.0
    %280 = vmatpush1.msra.mxu0 %v243
    %281 = vmatprep.subr.mxu0 0.0
    %282 = vmatpush1.msra.mxu0 %v244
    %283 = vmatprep.subr.mxu0 0.0
    %284 = vmatpush1.msra.mxu0 %v245
    %285 = vmatprep.subr.mxu0 0.0
    %286 = vmatpush1.msra.mxu0 %v246
    %287 = vmatprep.subr.mxu0 0.0
    %288 = vmatpush1.msra.mxu0 0.0
    %289 = vmatprep.subr.mxu0 0.0
    %290 = vmatpush1.msra.mxu0 0.0
    %291 = vmatprep.subr.mxu0 0.0
    %292 = vmatpush1.msra.mxu0 0.0
    %293 = vmatprep.subr.mxu0 0.0
    %294 = vmatpush1.msra.mxu0 0.0
    %295 = vmatprep.subr.mxu0 0.0
    %296 = vmatpush1.msra.mxu0 0.0
    %297 = vmatprep.subr.mxu0 0.0
    %298 = vmatpush1.msra.mxu0 0.0
    %299 = vmatprep.subr.mxu0 0.0
    %300 = vmatpush1.msra.mxu0 0.0
    %301 = vmatprep.subr.mxu0 0.0
    %302 = vmatpush1.msra.mxu0 0.0
    %303 = vmatprep.subr.mxu0 0.0
    %304 = vmatpush1.msra.mxu0 0.0
    %305 = vmatprep.subr.mxu0 0.0
    %306 = vmatpush1.msra.mxu0 0.0
    %307 = vmatprep.subr.mxu0 0.0
    %308 = vmatpush1.msra.mxu0 0.0
    %309 = vmatprep.subr.mxu0 0.0
    %310 = vmatpush1.msra.mxu0 0.0
    %311 = vmatprep.subr.mxu0 0.0
    %312 = vmatpush1.msra.mxu0 0.0
    %313 = vmatprep.subr.mxu0 0.0
    %314 = vmatpush1.msra.mxu0 0.0
    %315 = vmatprep.subr.mxu0 0.0
    %316 = vmatpush1.msra.mxu0 0.0
    %317 = vmatprep.subr.mxu0 0.0
    %318 = vmatpush1.msra.mxu0 0.0
    %319 = vmatprep.mubr.f32.mxu0 0.0
    %320 = vmatmul.mubr.f32.gmra.mrb[0].mxu0 %v229
    %v321 = vpop.f32.mrb[0].mxu0
    %v322 = vadd.f32 %v253, %v321
    %v323 = vpop.f32.mrb[0].mxu0
    %324 = vdwg.mxu0
    %v325 = vmax.f32 %v322, 0.0
    %s326 = scalar_lea.vmem [#allocation7], 384
    %v327 = vld [vmem:[%s326] sm:$0xff]
    %v328 = vld [vmem:[%s326 + $0x8] sm:$0xff]
    %v329 = vld [vmem:[%s326 + $0x10] sm:$0xff]
    %v330 = vld [vmem:[%s326 + $0x18] sm:$0xff]
    %v331 = vld [vmem:[%s326 + $0x20] sm:$0xff]
    %v332 = vld [vmem:[%s326 + $0x28] sm:$0xff]
    %v333 = vld [vmem:[%s326 + $0x30] sm:$0xff]
    %v334 = vld [vmem:[%s326 + $0x38] sm:$0xff]
    %v335 = vld [vmem:[%s326 + $0x40] sm:$0xff]
    %v336 = vld [vmem:[%s326 + $0x48] sm:$0xff]
    %v337 = vld [vmem:[%s326 + $0x50] sm:$0xff]
    %v338 = vld [vmem:[%s326 + $0x58] sm:$0xff]
    %v339 = vld [vmem:[%s326 + $0x60] sm:$0xff]
    %v340 = vld [vmem:[%s326 + $0x68] sm:$0xff]
    %v341 = vld [vmem:[%s326 + $0x70] sm:$0xff]
    %v342 = vld [vmem:[%s326 + $0x78] sm:$0xff]
    %s343 = scalar_lea.vmem %s1, 3
    %v344 = vld [vmem:[%s343] sm:$0x1]
    %v346 = vlaneseq
    %v347 = vshrl.u32 %v346, 7
    %v348 = vsub.s32 0, %v347
    %v349 = vrot.slane %v344, %v348
    %351 = vmatprep.subr.mxu0 0.0
    %352 = vmatpush1.msra.mxu0 %v327
    %353 = vmatprep.subr.mxu0 0.0
    %354 = vmatpush1.msra.mxu0 %v328
    %355 = vmatprep.subr.mxu0 0.0
    %356 = vmatpush1.msra.mxu0 %v329
    %357 = vmatprep.subr.mxu0 0.0
    %358 = vmatpush1.msra.mxu0 %v330
    %359 = vmatprep.subr.mxu0 0.0
    %360 = vmatpush1.msra.mxu0 %v331
    %361 = vmatprep.subr.mxu0 0.0
    %362 = vmatpush1.msra.mxu0 %v332
    %363 = vmatprep.subr.mxu0 0.0
    %364 = vmatpush1.msra.mxu0 %v333
    %365 = vmatprep.subr.mxu0 0.0
    %366 = vmatpush1.msra.mxu0 %v334
    %367 = vmatprep.subr.mxu0 0.0
    %368 = vmatpush1.msra.mxu0 %v335
    %369 = vmatprep.subr.mxu0 0.0
    %370 = vmatpush1.msra.mxu0 %v336
    %371 = vmatprep.subr.mxu0 0.0
    %372 = vmatpush1.msra.mxu0 %v337
    %373 = vmatprep.subr.mxu0 0.0
    %374 = vmatpush1.msra.mxu0 %v338
    %375 = vmatprep.subr.mxu0 0.0
    %376 = vmatpush1.msra.mxu0 %v339
    %377 = vmatprep.subr.mxu0 0.0
    %378 = vmatpush1.msra.mxu0 %v340
    %379 = vmatprep.subr.mxu0 0.0
    %380 = vmatpush1.msra.mxu0 %v341
    %381 = vmatprep.subr.mxu0 0.0
    %382 = vmatpush1.msra.mxu0 %v342
    %383 = vmatprep.subr.mxu0 0.0
    %384 = vmatpush1.msra.mxu0 0.0
    %385 = vmatprep.subr.mxu0 0.0
    %386 = vmatpush1.msra.mxu0 0.0
    %387 = vmatprep.subr.mxu0 0.0
    %388 = vmatpush1.msra.mxu0 0.0
    %389 = vmatprep.subr.mxu0 0.0
    %390 = vmatpush1.msra.mxu0 0.0
    %391 = vmatprep.subr.mxu0 0.0
    %392 = vmatpush1.msra.mxu0 0.0
    %393 = vmatprep.subr.mxu0 0.0
    %394 = vmatpush1.msra.mxu0 0.0
    %395 = vmatprep.subr.mxu0 0.0
    %396 = vmatpush1.msra.mxu0 0.0
    %397 = vmatprep.subr.mxu0 0.0
    %398 = vmatpush1.msra.mxu0 0.0
    %399 = vmatprep.subr.mxu0 0.0
    %400 = vmatpush1.msra.mxu0 0.0
    %401 = vmatprep.subr.mxu0 0.0
    %402 = vmatpush1.msra.mxu0 0.0
    %403 = vmatprep.subr.mxu0 0.0
    %404 = vmatpush1.msra.mxu0 0.0
    %405 = vmatprep.subr.mxu0 0.0
    %406 = vmatpush1.msra.mxu0 0.0
    %407 = vmatprep.subr.mxu0 0.0
    %408 = vmatpush1.msra.mxu0 0.0
    %409 = vmatprep.subr.mxu0 0.0
    %410 = vmatpush1.msra.mxu0 0.0
    %411 = vmatprep.subr.mxu0 0.0
    %412 = vmatpush1.msra.mxu0 0.0
    %413 = vmatprep.subr.mxu0 0.0
    %414 = vmatpush1.msra.mxu0 0.0
    %415 = vmatprep.mubr.f32.mxu0 0.0
    %416 = vmatmul.mubr.f32.gmra.mrb[0].mxu0 %v325
    %v417 = vpop.f32.mrb[0].mxu0
    %v418 = vadd.f32 %v349, %v417
    %v419 = vpop.f32.mrb[0].mxu0
    %420 = vdwg.mxu0
    %v421 = vmax.f32 %v418, 0.0
    %422 = vst [vmem:[#allocation10] sm:$0xff] %v421
    // Predicated region
    $region18: #{_ae_forward_jit.2} parent=1 // pred_check
      _
    $region19: #{_ae_forward_jit.2} parent=1 // pred_check_branch
      %424 = sbr.rel (0) target = $region21
    $region20: #{_ae_forward_jit.2} parent=1 // pred_region
      %s426 = ssub.s32 128, 128
      %427 = vsyncadd [#allocation9], %s426
      %s429 = sshll.u32 [#allocation10], 4
      %s430 = int_to_ptr.vmem [resolvable:$true] %s429
      %432 = dma.vmem_to_hbm [thread:$0]  %s430, 128, %s4, [#allocation9]
    $region21: #{_ae_forward_jit.2} parent=1 // pred_fallthru
      _
    // Predicated region
    $region22: #{_ae_forward_jit.2} parent=1 // pred_check
      _
    $region23: #{_ae_forward_jit.2} parent=1 // pred_check_branch
      %434 = sbr.rel (0) target = $region25
    $region24: #{_ae_forward_jit.2} parent=1 // pred_region
      %435 = dma.done [#allocation9], 128
    $region25: #{_ae_forward_jit.2} parent=1 // pred_fallthru
      _
    %436 = vsyncpa [#allocation8], 1
    %437 = vsyncpa [#allocation9], 1

</llo_original>
